<compile_context>
chip_gen: v5e
topology: v5e:2x2
jax: 0.10.0
libtpu: 0.0.40
codegen_flags: <defaults>
</compile_context>

<pallas_src>
import functools
import math

import jax
import jax.numpy as jnp
from jax.experimental import pallas as pl
from jax.experimental.pallas import tpu as pltpu

HIDDEN_OUT = 512            # fixed by the module: Linear(hidden_dim, 512)
LN_EPS = 1e-5               # nn.LayerNorm default eps
GELU_C = math.sqrt(2.0 / math.pi)


def _round_up(x, m):
    return (x + m - 1) // m * m


# --------------------------------------------------------------------------- #
# Kernels
# --------------------------------------------------------------------------- #
def _epilogue(h_f32, c_f32, b2):
    """+b1 -> GeLU(tanh) -> LayerNorm(512) -> Linear(512, 1), all in f32."""
    b1, gamma, beta, w2 = c_f32[0:1], c_f32[1:2], c_f32[2:3], c_f32[3:4]
    h = h_f32 + b1
    # TODO(synk): if the original GeLU class uses the exact erf form, replace
    # the tanh-approximation line below with 0.5*h*(1 + erf(h/sqrt(2))).
    h = 0.5 * h * (1.0 + jnp.tanh(GELU_C * (h + 0.044715 * h * h * h)))
    mean = jnp.mean(h, axis=-1, keepdims=True)
    diff = h - mean
    var = jnp.mean(diff * diff, axis=-1, keepdims=True)
    hn = diff * jax.lax.rsqrt(var + LN_EPS)
    hn = hn * gamma + beta
    # Linear(512, 1): VPU multiply + lane reduction (keeps the MXU free of a
    # degenerate N=1 matmul and avoids a single-lane (512, 1) weight block).
    return jnp.sum(hn * w2, axis=-1, keepdims=True) + b2


def _disc_kernel_single(x_ref, w1_ref, c_ref, b2_ref, o_ref):
    """Single K step: W1 block index is constant -> DMA'd once, kept resident."""
    h = jnp.dot(x_ref[...], w1_ref[...], preferred_element_type=jnp.float32)
    out = _epilogue(h, c_ref[...].astype(jnp.float32), b2_ref[0, 0])
    o_ref[...] = out.astype(o_ref.dtype)


def _disc_kernel_ktiled(x_ref, w1_ref, c_ref, b2_ref, o_ref, acc_ref, *,
                        d_total, tk, mask_last_k):
    """K-tiled accumulation (huge D); last partial K tile masked in-kernel."""
    k = pl.program_id(1)
    x = x_ref[...]
    if mask_last_k:
        # Zero the out-of-range feature columns of the last K tile.  x is never
        # padded in HBM; W1's padded rows are already zero, so the masked tail
        # contributes exactly zero to the accumulation.
        col = jax.lax.broadcasted_iota(jnp.int32, x.shape, 1)
        x = jnp.where(col < (d_total - k * tk), x, jnp.zeros_like(x))
    part = jnp.dot(x, w1_ref[...], preferred_element_type=jnp.float32)

    @pl.when(k == 0)
    def _():
        acc_ref[...] = part                 # no zero-fill / read-add on step 0

    @pl.when(k > 0)
    def _():
        acc_ref[...] += part

    @pl.when(k == pl.num_programs(1) - 1)
    def _():
        out = _epilogue(acc_ref[...], c_ref[...].astype(jnp.float32),
                        b2_ref[0, 0])
        o_ref[...] = out.astype(o_ref.dtype)


# --------------------------------------------------------------------------- #
# Wrapper
# --------------------------------------------------------------------------- #
def _vmem_capacity_bytes():
    try:
        cap = getattr(pltpu.get_tpu_info(), "vmem_capacity_bytes", None)
        if cap:
            return int(cap)
    except Exception:
        pass
    return 64 * 1024 * 1024     # conservative fallback (fits all generations)


def _num_tensorcores():
    """TensorCores per device: 2 on megacore (v4/v5p) and v7x parts, else 1."""
    try:
        kind = jax.devices()[0].device_kind.lower()
    except Exception:
        return 1
    if "lite" in kind or "v5e" in kind or "v6e" in kind:
        return 1
    if "v4" in kind or "v5p" in kind or "v5 p" in kind or "7" in kind:
        return 2
    return 1


def discriminator_forward(x, params, *, block_b=512, block_k=2048,
                          force_k_tiling=False):
    """x: (B, ...) — flattened to (B, D) like x.view(B, -1) in the module."""
    B = x.shape[0]
    x2 = x.reshape(B, -1)
    D = x2.shape[1]
    out_dtype = x2.dtype

    w1, b1, gamma, beta, w2, b2 = params
    assert w1.shape == (D, HIDDEN_OUT)

    # bf16 matmul operands: native MXU rate + half the x/W1 HBM+DMA bytes.
    # (In a training loop the weight cast / const folding below is one-time
    #  prep and should be hoisted out of the per-step path.)
    x2 = x2.astype(jnp.bfloat16)
    w1b = w1.astype(jnp.bfloat16)

    vmem_cap = _vmem_capacity_bytes()
    budget = int(0.80 * vmem_cap)
    n_cores = _num_tensorcores()

    # ---- batch tiling: even split, minimal (usually zero) padding ------------
    if B >= 4 * block_b:
        block_b = max(block_b, 1024)
    n_bt = max(1, pl.cdiv(B, block_b))
    if n_bt == 1 and n_cores >= 2 and B >= 256:
        n_bt = 2          # shard the "parallel" batch axis across both TCs
    if n_bt == 1:
        tb, B_pad = B, B                      # full-dim block: no alignment pad
    else:
        tb = _round_up(pl.cdiv(B, n_bt), 8)
        B_pad = _round_up(B, tb)              # pads <= tb-1 rows (usually 0)

    misc = 2 * 8 * HIDDEN_OUT * 4 + 2 * tb * 4 + (2 << 20)  # consts + out + slack

    # ---- feature (K) tiling ---------------------------------------------------
    resident_need = 2 * tb * D * 2 + 2 * D * HIDDEN_OUT * 2 + misc
    single_k = (not force_k_tiling) and (resident_need <= budget)
    if single_k:
        tk, n_k, mask_k = D, 1, False
        w1p = w1b
        need = resident_need
    else:
        tk = max(128, min(_round_up(block_k, 128), _round_up(D, 128)))

        def _tiled_need(t):
            return (2 * tb * t * 2 + 2 * t * HIDDEN_OUT * 2
                    + tb * HIDDEN_OUT * 4 + misc)

        while tk > 128 and _tiled_need(tk) > budget:
            tk -= 128
        n_k = pl.cdiv(D, tk)
        mask_k = (D % tk) != 0
        # One-time zero pad of W1's K rows only; x is never padded along K.
        w1p = jnp.pad(w1b, ((0, n_k * tk - D), (0, 0))) if mask_k else w1b
        need = _tiled_need(tk)

    if B_pad != B:
        # Minimal batch-only pad (few rows); the feature dim is never padded.
        x2 = jnp.pad(x2, ((0, B_pad - B), (0, 0)))

    # Fold the small per-feature params into one (8, 512) f32 VMEM slab:
    #   row 0: b1, row 1: gamma, row 2: beta, row 3: w2.  b2 is a scalar in SMEM.
    consts = jnp.zeros((8, HIDDEN_OUT), jnp.float32)
    consts = consts.at[0].set(b1.reshape(-1).astype(jnp.float32))
    consts = consts.at[1].set(gamma.reshape(-1).astype(jnp.float32))
    consts = consts.at[2].set(beta.reshape(-1).astype(jnp.float32))
    consts = consts.at[3].set(w2.reshape(-1).astype(jnp.float32))
    b2s = jnp.asarray(b2, jnp.float32).reshape(1, 1)

    # Chip-aware VMEM budget: cap at 85% of physical so Mosaic keeps headroom.
    vmem_limit = int(min(int(0.85 * vmem_cap),
                         max(2 * need, 32 * 1024 * 1024)))

    if single_k:
        out = pl.pallas_call(
            _disc_kernel_single,
            out_shape=jax.ShapeDtypeStruct((B_pad, 1), out_dtype),
            grid_spec=pltpu.PrefetchScalarGridSpec(
                num_scalar_prefetch=0,
                grid=(B_pad // tb,),
                in_specs=[
                    pl.BlockSpec((tb, D), lambda i: (i, 0)),            # x tile
                    # Constant block index -> W1 DMA'd once, stays resident.
                    # TODO(synk): pipeline_mode=pl.Buffered(1) would halve the
                    # resident W1 footprint; left at default buffering for
                    # compatibility.
                    pl.BlockSpec((D, HIDDEN_OUT), lambda i: (0, 0)),    # W1
                    pl.BlockSpec((8, HIDDEN_OUT), lambda i: (0, 0)),    # consts
                    pl.BlockSpec(memory_space=pltpu.MemorySpace.SMEM),  # b2
                ],
                out_specs=pl.BlockSpec((tb, 1), lambda i: (i, 0)),
            ),
            compiler_params=pltpu.CompilerParams(
                dimension_semantics=("parallel",),
                vmem_limit_bytes=vmem_limit),
        )(x2, w1p, consts, b2s)
    else:
        kernel = functools.partial(_disc_kernel_ktiled, d_total=D, tk=tk,
                                   mask_last_k=mask_k)
        out = pl.pallas_call(
            kernel,
            out_shape=jax.ShapeDtypeStruct((B_pad, 1), out_dtype),
            grid_spec=pltpu.PrefetchScalarGridSpec(
                num_scalar_prefetch=0,
                grid=(B_pad // tb, n_k),
                in_specs=[
                    pl.BlockSpec((tb, tk), lambda i, k: (i, k)),         # x tile
                    pl.BlockSpec((tk, HIDDEN_OUT), lambda i, k: (k, 0)), # W1 slab
                    pl.BlockSpec((8, HIDDEN_OUT), lambda i, k: (0, 0)),  # consts
                    pl.BlockSpec(memory_space=pltpu.MemorySpace.SMEM),   # b2
                ],
                out_specs=pl.BlockSpec((tb, 1), lambda i, k: (i, 0)),
                scratch_shapes=[pltpu.VMEM((tb, HIDDEN_OUT), jnp.float32)],
            ),
            compiler_params=pltpu.CompilerParams(
                dimension_semantics=("parallel", "arbitrary"),
                vmem_limit_bytes=vmem_limit),
        )(x2, w1p, consts, b2s)

    return out[:B] if B_pad != B else out


# --------------------------------------------------------------------------- #
# Reference + demo
# --------------------------------------------------------------------------- #
def init_params(key, hidden_dim):
    """Deterministic parameter init (shapes per nn.Linear / nn.LayerNorm)."""
    k1, k2, k3, k4 = jax.random.split(key, 4)
    s1 = 1.0 / math.sqrt(hidden_dim)
    s2 = 1.0 / math.sqrt(HIDDEN_OUT)
    w1 = jax.random.uniform(k1, (hidden_dim, HIDDEN_OUT), jnp.float32, -s1, s1)
    b1 = jax.random.uniform(k2, (1, HIDDEN_OUT), jnp.float32, -s1, s1)
    gamma = jnp.ones((1, HIDDEN_OUT), jnp.float32)
    beta = jnp.zeros((1, HIDDEN_OUT), jnp.float32)
    w2 = jax.random.uniform(k3, (HIDDEN_OUT, 1), jnp.float32, -s2, s2)
    b2 = jax.random.uniform(k4, (1, 1), jnp.float32, -s2, s2)
    return (w1, b1, gamma, beta, w2, b2)


def _ref_forward(x, params, *, bf16_matmul=True):
    """Pure-JAX reference. bf16_matmul=True mirrors the kernel's MXU numerics."""
    w1, b1, gamma, beta, w2, b2 = params
    x2 = x.reshape(x.shape[0], -1)
    if bf16_matmul:
        h = jnp.dot(x2.astype(jnp.bfloat16), w1.astype(jnp.bfloat16),
                    preferred_element_type=jnp.float32)
    else:
        h = jnp.dot(x2.astype(jnp.float32), w1.astype(jnp.float32),
                    preferred_element_type=jnp.float32,
                    precision=jax.lax.Precision.HIGHEST)
    h = h + b1
    h = 0.5 * h * (1.0 + jnp.tanh(GELU_C * (h + 0.044715 * h ** 3)))
    mean = jnp.mean(h, axis=-1, keepdims=True)
    var = jnp.mean((h - mean) ** 2, axis=-1, keepdims=True)
    hn = (h - mean) * jax.lax.rsqrt(var + LN_EPS) * gamma + beta
    return jnp.sum(hn * w2.reshape(1, -1), axis=-1, keepdims=True) + b2


if __name__ == "__main__":
    key = jax.random.PRNGKey(0)
    keys = jax.random.split(key, 8)

    def _check(x, params, tight=2e-3, loose=5e-2, **kw):
        out = jax.block_until_ready(discriminator_forward(x, params, **kw))
        assert out.shape == (x.shape[0], 1)
        ref_bf16 = _ref_forward(x, params, bf16_matmul=True)   # kernel numerics
        ref_f32 = _ref_forward(x, params, bf16_matmul=False)   # module-exact f32
        assert jnp.allclose(out, ref_bf16, atol=tight, rtol=tight), "kernel mismatch"
        assert jnp.allclose(out, ref_f32, atol=loose, rtol=loose), "drift vs f32 ref"
        return out

    # 1) small single-tile, single-K (W1-resident) case
    x1 = jax.random.normal(keys[0], (8, 32), jnp.float32)
    _check(x1, init_params(keys[1], 32))

    # 2) ragged batch + non-128-aligned feature dim: full-dim blocks, no padding
    xr = jax.random.normal(keys[2], (10, 200), jnp.float32)
    _check(xr, init_params(keys[3], 200))

    # 3) K-tiled accumulation path (evenly dividing K tiles)
    xk = jax.random.normal(keys[4], (16, 384), jnp.float32)
    _check(xk, init_params(keys[5], 384), block_k=128, force_k_tiling=True)

    # 4) K-tiled path with a masked (non-dividing) last K tile, x never padded
    xm = jax.random.normal(keys[6], (10, 200), jnp.float32)
    _check(xm, init_params(keys[7], 200), block_k=128, force_k_tiling=True)

    print("KERNEL_OK")
</pallas_src>

<mosaic_0001>
module attributes {stable_mosaic.version = 11 : i64} {
  func.func @_disc_kernel_single(%arg0: i32, %arg1: memref<8x32xbf16, #tpu.memory_space<vmem>>, %arg2: memref<32x512xbf16, #tpu.memory_space<vmem>>, %arg3: memref<8x512xf32, #tpu.memory_space<vmem>>, %arg4: memref<1x1xf32, #tpu.memory_space<smem>>, %arg5: memref<8x1xf32, #tpu.memory_space<vmem>>) attributes {dimension_semantics = [#tpu.dimension_semantics<parallel>], iteration_bounds = array<i64: 1>, scalar_prefetch = 0 : i64, scratch_operands = 0 : i64, tpu.core_type = #tpu.core_type<tc>, window_params = [{transform_indices = @transform_0, window_bounds = array<i64: 8, 32>}, {pipeline_mode = #tpu.pipeline_mode<synchronous>, transform_indices = @transform_1, window_bounds = array<i64: 32, 512>}, {pipeline_mode = #tpu.pipeline_mode<synchronous>, transform_indices = @transform_2, window_bounds = array<i64: 8, 512>}, {transform_indices = @transform_3, window_bounds = array<i64: 1, 1>}, {transform_indices = @transform_4, window_bounds = array<i64: 8, 1>}]} {
    %c0 = arith.constant 0 : index
    %c0_0 = arith.constant 0 : index
    %0 = vector.load %arg1[%c0, %c0_0] : memref<8x32xbf16, #tpu.memory_space<vmem>>, vector<8x32xbf16>
    %c0_1 = arith.constant 0 : index
    %c0_2 = arith.constant 0 : index
    %1 = vector.load %arg2[%c0_1, %c0_2] : memref<32x512xbf16, #tpu.memory_space<vmem>>, vector<32x512xbf16>
    %cst = arith.constant dense<0.000000e+00> : vector<8x512xf32>
    %2 = tpu.matmul %0, %1, %cst {dimension_numbers = #tpu.dot_dimension_numbers<[1], [0], [0], [1], [0, 0, 1, 1], [], []>} : vector<8x32xbf16>, vector<32x512xbf16>, vector<8x512xf32> -> vector<8x512xf32>
    %c0_3 = arith.constant 0 : index
    %c0_4 = arith.constant 0 : index
    %3 = vector.load %arg3[%c0_3, %c0_4] : memref<8x512xf32, #tpu.memory_space<vmem>>, vector<8x512xf32>
    %c0_5 = arith.constant 0 : index
    %c0_6 = arith.constant 0 : index
    %4 = memref.load %arg4[%c0_5, %c0_6] : memref<1x1xf32, #tpu.memory_space<smem>>
    %5 = vector.extract_strided_slice %3 {offsets = [0, 0], sizes = [1, 512], strides = [1, 1]} : vector<8x512xf32> to vector<1x512xf32>
    %6 = vector.extract_strided_slice %3 {offsets = [1, 0], sizes = [1, 512], strides = [1, 1]} : vector<8x512xf32> to vector<1x512xf32>
    %7 = vector.extract_strided_slice %3 {offsets = [2, 0], sizes = [1, 512], strides = [1, 1]} : vector<8x512xf32> to vector<1x512xf32>
    %8 = vector.extract_strided_slice %3 {offsets = [3, 0], sizes = [1, 512], strides = [1, 1]} : vector<8x512xf32> to vector<1x512xf32>
    %9 = vector.broadcast %5 : vector<1x512xf32> to vector<8x512xf32>
    %10 = arith.addf %2, %9 : vector<8x512xf32>
    %cst_7 = arith.constant 5.000000e-01 : f32
    %11 = vector.broadcast %cst_7 : f32 to vector<8x512xf32>
    %12 = arith.mulf %11, %10 : vector<8x512xf32>
    %cst_8 = arith.constant 4.471500e-02 : f32
    %13 = vector.broadcast %cst_8 : f32 to vector<8x512xf32>
    %14 = arith.mulf %13, %10 : vector<8x512xf32>
    %15 = arith.mulf %14, %10 : vector<8x512xf32>
    %16 = arith.mulf %15, %10 : vector<8x512xf32>
    %17 = arith.addf %10, %16 : vector<8x512xf32>
    %cst_9 = arith.constant 0.797884583 : f32
    %18 = vector.broadcast %cst_9 : f32 to vector<8x512xf32>
    %19 = arith.mulf %18, %17 : vector<8x512xf32>
    %20 = math.tanh %19 : vector<8x512xf32>
    %cst_10 = arith.constant 1.000000e+00 : f32
    %21 = vector.broadcast %cst_10 : f32 to vector<8x512xf32>
    %22 = arith.addf %21, %20 : vector<8x512xf32>
    %23 = arith.mulf %12, %22 : vector<8x512xf32>
    %cst_11 = arith.constant dense<0.000000e+00> : vector<8xf32>
    %24 = vector.multi_reduction <add>, %23, %cst_11 [1] : vector<8x512xf32> to vector<8xf32>
    %25 = vector.shape_cast %24 : vector<8xf32> to vector<8x1xf32>
    %cst_12 = arith.constant 5.120000e+02 : f32
    %26 = vector.broadcast %cst_12 : f32 to vector<8x1xf32>
    %27 = arith.divf %25, %26 : vector<8x1xf32>
    %28 = vector.broadcast %27 : vector<8x1xf32> to vector<8x512xf32>
    %29 = arith.subf %23, %28 : vector<8x512xf32>
    %30 = arith.mulf %29, %29 : vector<8x512xf32>
    %cst_13 = arith.constant dense<0.000000e+00> : vector<8xf32>
    %31 = vector.multi_reduction <add>, %30, %cst_13 [1] : vector<8x512xf32> to vector<8xf32>
    %32 = vector.shape_cast %31 : vector<8xf32> to vector<8x1xf32>
    %cst_14 = arith.constant 5.120000e+02 : f32
    %33 = vector.broadcast %cst_14 : f32 to vector<8x1xf32>
    %34 = arith.divf %32, %33 : vector<8x1xf32>
    %cst_15 = arith.constant 9.99999974E-6 : f32
    %35 = vector.broadcast %cst_15 : f32 to vector<8x1xf32>
    %36 = arith.addf %34, %35 : vector<8x1xf32>
    %37 = math.rsqrt %36 : vector<8x1xf32>
    %38 = vector.broadcast %37 : vector<8x1xf32> to vector<8x512xf32>
    %39 = arith.mulf %29, %38 : vector<8x512xf32>
    %40 = vector.broadcast %6 : vector<1x512xf32> to vector<8x512xf32>
    %41 = arith.mulf %39, %40 : vector<8x512xf32>
    %42 = vector.broadcast %7 : vector<1x512xf32> to vector<8x512xf32>
    %43 = arith.addf %41, %42 : vector<8x512xf32>
    %44 = vector.broadcast %8 : vector<1x512xf32> to vector<8x512xf32>
    %45 = arith.mulf %43, %44 : vector<8x512xf32>
    %cst_16 = arith.constant dense<0.000000e+00> : vector<8xf32>
    %46 = vector.multi_reduction <add>, %45, %cst_16 [1] : vector<8x512xf32> to vector<8xf32>
    %47 = vector.shape_cast %46 : vector<8xf32> to vector<8x1xf32>
    %48 = vector.broadcast %4 : f32 to vector<8x1xf32>
    %49 = arith.addf %47, %48 : vector<8x1xf32>
    %c0_17 = arith.constant 0 : index
    %c0_18 = arith.constant 0 : index
    %50 = vector.load %arg5[%c0_17, %c0_18] : memref<8x1xf32, #tpu.memory_space<vmem>>, vector<8x1xf32>
    tpu.vector_store %arg5[%c0_17, %c0_18], %49 {strides = array<i32>} : memref<8x1xf32, #tpu.memory_space<vmem>>, vector<8x1xf32>,
    return
  }
  func.func @transform_0(%arg0: i32) -> (i32, i32) {
    %c0_i32 = arith.constant 0 : i32
    %c0_i32_0 = arith.constant 0 : i32
    return %arg0, %c0_i32 : i32, i32
  }
  func.func @transform_1(%arg0: i32) -> (i32, i32) {
    %c0_i32 = arith.constant 0 : i32
    %c0_i32_0 = arith.constant 0 : i32
    %c0_i32_1 = arith.constant 0 : i32
    return %c0_i32, %c0_i32_0 : i32, i32
  }
  func.func @transform_2(%arg0: i32) -> (i32, i32) {
    %c0_i32 = arith.constant 0 : i32
    %c0_i32_0 = arith.constant 0 : i32
    %c0_i32_1 = arith.constant 0 : i32
    return %c0_i32, %c0_i32_0 : i32, i32
  }
  func.func @transform_3(%arg0: i32) -> (i32, i32) {
    %c0_i32 = arith.constant 0 : i32
    %c0_i32_0 = arith.constant 0 : i32
    %c0_i32_1 = arith.constant 0 : i32
    return %c0_i32, %c0_i32_0 : i32, i32
  }
  func.func @transform_4(%arg0: i32) -> (i32, i32) {
    %c0_i32 = arith.constant 0 : i32
    %c0_i32_0 = arith.constant 0 : i32
    return %arg0, %c0_i32 : i32, i32
  }
}

</mosaic_0001>

<llo_original>
// kernel: tpu_custom_call.1
$region0: #{tpu_custom_call.1}
  #allocation0 [shape = 'u32[]', space=smem, size = 0x4, offset = 0x4, fixed_abs, tag = 'smem constant byte address 0x4 - core index']
  #allocation1 [shape = 'u32[72,128]{1,0:T(1,128)}', space=vmem, size = 0x9000, scoped, tag = 'internal scratch']
  #allocation2 [shape = 'f32[1,1]{1,0:T(1,128)S(6)}', space=smem, size = 0x200, scoped, tag = 'scoped memory for tpu_custom_call.1']
  %s0 = inlined_call_operand.hbm [shape: bf16[8,32], index: 0, kind: input, shape index: {}]
  %s1 = inlined_call_operand.hbm [shape: bf16[32,512], index: 1, kind: input, shape index: {}]
  %s2 = inlined_call_operand.hbm [shape: f32[8,512], index: 2, kind: input, shape index: {}]
  %s3 = inlined_call_operand.<no memory space> [shape: f32[1,1], index: 3, kind: input, shape index: {}]
  %s4 = inlined_call_operand.vmem [shape: f32[8,1], index: 4, kind: output, shape index: {}]
  %s5 = sld [smem:[#allocation0]]
  $region38: #{tpu_custom_call.1} parent=0
    _
  %s7 = ssub.s32 1, %s5
  %s8 = scalar_select 0, %s7, %s5
  %9 = sst [smem:[#allocation2]] %s3
  $region1: #{tpu_custom_call.1} parent=0
    #allocation3 [shape = 'u8[2048]{0}', space=vmem, size = 0x800, scoped, tag = 'input window, operand 0, single buffered']
    #allocation4 [shape = 's32[1]{0}', space=sflag, size = 0x4, scoped, tag = 'scoped memory for tpu_custom_call.1']
    #allocation5 [shape = 'u8[32768]{0}', space=vmem, size = 0x8000, scoped, tag = 'input window, operand 1, single buffered']
    #allocation6 [shape = 's32[1]{0}', space=sflag, size = 0x4, scoped, tag = 'scoped memory for tpu_custom_call.1']
    #allocation7 [shape = 'u8[16384]{0}', space=vmem, size = 0x4000, scoped, tag = 'input window, operand 2, single buffered']
    %10 = vsyncpa [#allocation4], 0
    %11 = vsyncpa [#allocation6], 0
    // Predicated region
    $region2: #{tpu_custom_call.1} parent=1 // pred_check
      _
    $region3: #{tpu_custom_call.1} parent=1 // pred_check_branch
      %13 = sbr.rel (0) target = $region5
    $region4: #{tpu_custom_call.1} parent=1 // pred_region
      %15 = vsyncadd [#allocation4], 0
      %s17 = sshll.u32 %s0, 4
      %s18 = int_to_ptr.hbm [resolvable:$true] %s17
      %s19 = sshll.u32 [#allocation3], 4
      %s20 = int_to_ptr.vmem [resolvable:$true] %s19
      %22 = dma.hbm_to_vmem [thread:$0]  %s18, 64, %s20, [#allocation4]
    $region5: #{tpu_custom_call.1} parent=1 // pred_fallthru
      _
    // Predicated region
    $region6: #{tpu_custom_call.1} parent=1 // pred_check
      _
    $region7: #{tpu_custom_call.1} parent=1 // pred_check_branch
      %24 = sbr.rel (0) target = $region9
    $region8: #{tpu_custom_call.1} parent=1 // pred_region
      %26 = vsyncadd [#allocation6], 0
      %s27 = sshll.u32 %s1, 4
      %s28 = int_to_ptr.hbm [resolvable:$true] %s27
      %s29 = sshll.u32 [#allocation5], 4
      %s30 = int_to_ptr.vmem [resolvable:$true] %s29
      %35 = dma.hbm_to_vmem [thread:$0]  %s28, 1024, %s30, [#allocation6], 256, 256, 16
    $region9: #{tpu_custom_call.1} parent=1 // pred_fallthru
      _
    // Predicated region
    $region10: #{tpu_custom_call.1} parent=1 // pred_check
      _
    $region11: #{tpu_custom_call.1} parent=1 // pred_check_branch
      %37 = sbr.rel (0) target = $region13
    $region12: #{tpu_custom_call.1} parent=1 // pred_region
      %39 = vsyncadd [#allocation6], 0
      %s41 = sshll.u32 %s2, 4
      %s42 = int_to_ptr.hbm [resolvable:$true] %s41
      %s43 = sshll.u32 [#allocation7], 4
      %s44 = int_to_ptr.vmem [resolvable:$true] %s43
      %46 = dma.hbm_to_vmem [thread:$0]  %s42, 512, %s44, [#allocation6]
    $region13: #{tpu_custom_call.1} parent=1 // pred_fallthru
      _
    // Predicated region
    $region14: #{tpu_custom_call.1} parent=1 // pred_check
      _
    $region15: #{tpu_custom_call.1} parent=1 // pred_check_branch
      %48 = sbr.rel (0) target = $region17
    $region16: #{tpu_custom_call.1} parent=1 // pred_region
      _
    $region17: #{tpu_custom_call.1} parent=1 // pred_fallthru
      _
    // Predicated region
    $region18: #{tpu_custom_call.1} parent=1 // pred_check
      _
    $region19: #{tpu_custom_call.1} parent=1 // pred_check_branch
      %50 = sbr.rel (0) target = $region21
    $region20: #{tpu_custom_call.1} parent=1 // pred_region
      %52 = dma.done [#allocation4], 64
    $region21: #{tpu_custom_call.1} parent=1 // pred_fallthru
      _
    // Predicated region
    $region22: #{tpu_custom_call.1} parent=1 // pred_check
      _
    $region23: #{tpu_custom_call.1} parent=1 // pred_check_branch
      %54 = sbr.rel (0) target = $region25
    $region24: #{tpu_custom_call.1} parent=1 // pred_region
      %56 = dma.done [#allocation6], 1024
    $region25: #{tpu_custom_call.1} parent=1 // pred_fallthru
      _
    // Predicated region
    $region26: #{tpu_custom_call.1} parent=1 // pred_check
      _
    $region27: #{tpu_custom_call.1} parent=1 // pred_check_branch
      %58 = sbr.rel (0) target = $region29
    $region28: #{tpu_custom_call.1} parent=1 // pred_region
      %60 = dma.done [#allocation6], 512
    $region29: #{tpu_custom_call.1} parent=1 // pred_fallthru
      _
    %v62 = vld [vmem:[#allocation3] sm:$0xf]
    %v63 = vld [vmem:[#allocation5] sm:$0xff]
    %v64 = vld [vmem:[#allocation5 + $0x8] sm:$0xff]
    %v65 = vld [vmem:[#allocation5 + $0x10] sm:$0xff]
    %v66 = vld [vmem:[#allocation5 + $0x18] sm:$0xff]
    %v67 = vld [vmem:[#allocation5 + $0x20] sm:$0xff]
    %v68 = vld [vmem:[#allocation5 + $0x28] sm:$0xff]
    %v69 = vld [vmem:[#allocation5 + $0x30] sm:$0xff]
    %v70 = vld [vmem:[#allocation5 + $0x38] sm:$0xff]
    %v71 = vld [vmem:[#allocation7] sm:$0xff]
    %v72 = vld [vmem:[#allocation7 + $0x8] sm:$0xff]
    %v73 = vld [vmem:[#allocation7 + $0x10] sm:$0xff]
    %v74 = vld [vmem:[#allocation7 + $0x18] sm:$0xff]
    %s75 = sld [smem:[#allocation2]]
    %v76 = vperm.slane %v71, 0
    %v77 = vperm.slane %v72, 0
    %v78 = vperm.slane %v73, 0
    %v79 = vperm.slane %v74, 0
    %v88 = vunpack.c.l.b16 %v63
    %v89 = vunpack.c.h.b16 %v63
    %v90 = vunpack.c.l.b16 %v64
    %v91 = vunpack.c.h.b16 %v64
    %v92 = vunpack.c.l.b16 %v65
    %v93 = vunpack.c.h.b16 %v65
    %v94 = vunpack.c.l.b16 %v66
    %v95 = vunpack.c.h.b16 %v66
    %v96 = vunpack.c.l.b16 %v67
    %v97 = vunpack.c.h.b16 %v67
    %v98 = vunpack.c.l.b16 %v68
    %v99 = vunpack.c.h.b16 %v68
    %v100 = vunpack.c.l.b16 %v69
    %v101 = vunpack.c.h.b16 %v69
    %v102 = vunpack.c.l.b16 %v70
    %v103 = vunpack.c.h.b16 %v70
    %v104 = vpack.c.b16 %v92, %v88
    %v105 = vpack.c.b16 %v93, %v89
    %v106 = vpack.c.b16 %v94, %v90
    %v107 = vpack.c.b16 %v95, %v91
    %v108 = vpack.c.b16 %v100, %v96
    %v109 = vpack.c.b16 %v101, %v97
    %v110 = vpack.c.b16 %v102, %v98
    %v111 = vpack.c.b16 %v103, %v99
    %vm120 = vcmask 261120
    %v122 = vsel %vm120, %v62, 0
    %124 = vmatpush.bf16.msra.mxu0 0
    %125 = vmatpush.bf16.msra.mxu0 0
    %126 = vmatpush.bf16.msra.mxu0 0
    %127 = vmatpush.bf16.msra.mxu0 0
    %128 = vmatpush.bf16.msra.mxu0 0
    %129 = vmatpush.bf16.msra.mxu0 0
    %130 = vmatpush.bf16.msra.mxu0 %v108
    %131 = vmatpush.bf16.msra.mxu0 %v104
    %132 = vmatmul.bf16.gmra.mxu0 %v122
    %v133 = vpop.f32.mrf.mxu0
    %v134 = vadd.f32 %v76, %v133
    %v135 = vpop.f32.mrf.mxu0
    %136 = vdwg.mxu0
    %137 = vmatpush.bf16.msra.mxu0 0
    %138 = vmatpush.bf16.msra.mxu0 0
    %139 = vmatpush.bf16.msra.mxu0 0
    %140 = vmatpush.bf16.msra.mxu0 0
    %141 = vmatpush.bf16.msra.mxu0 0
    %142 = vmatpush.bf16.msra.mxu0 0
    %143 = vmatpush.bf16.msra.mxu0 %v109
    %144 = vmatpush.bf16.msra.mxu0 %v105
    %145 = vmatmul.bf16.gmra.mxu0 %v122
    %v146 = vpop.f32.mrf.mxu0
    %v147 = vadd.f32 %v77, %v146
    %v148 = vpop.f32.mrf.mxu0
    %149 = vdwg.mxu0
    %150 = vmatpush.bf16.msra.mxu0 0
    %151 = vmatpush.bf16.msra.mxu0 0
    %152 = vmatpush.bf16.msra.mxu0 0
    %153 = vmatpush.bf16.msra.mxu0 0
    %154 = vmatpush.bf16.msra.mxu0 0
    %155 = vmatpush.bf16.msra.mxu0 0
    %156 = vmatpush.bf16.msra.mxu0 %v110
    %157 = vmatpush.bf16.msra.mxu0 %v106
    %158 = vmatmul.bf16.gmra.mxu0 %v122
    %v159 = vpop.f32.mrf.mxu0
    %v160 = vadd.f32 %v78, %v159
    %v161 = vpop.f32.mrf.mxu0
    %162 = vdwg.mxu0
    %163 = vmatpush.bf16.msra.mxu0 0
    %164 = vmatpush.bf16.msra.mxu0 0
    %165 = vmatpush.bf16.msra.mxu0 0
    %166 = vmatpush.bf16.msra.mxu0 0
    %167 = vmatpush.bf16.msra.mxu0 0
    %168 = vmatpush.bf16.msra.mxu0 0
    %169 = vmatpush.bf16.msra.mxu0 %v111
    %170 = vmatpush.bf16.msra.mxu0 %v107
    %171 = vmatmul.bf16.gmra.mxu0 %v122
    %v172 = vpop.f32.mrf.mxu0
    %v173 = vadd.f32 %v79, %v172
    %v174 = vpop.f32.mrf.mxu0
    %175 = vdwg.mxu0
    %v176 = vmul.f32 %v134, 0.5
    %v177 = vmul.f32 %v147, 0.5
    %v178 = vmul.f32 %v160, 0.5
    %v179 = vmul.f32 %v173, 0.5
    %v180 = vmul.f32 %v134, 0.044715
    %v181 = vmul.f32 %v147, 0.044715
    %v182 = vmul.f32 %v160, 0.044715
    %v183 = vmul.f32 %v173, 0.044715
    %v184 = vmul.f32 %v180, %v134
    %v185 = vmul.f32 %v181, %v147
    %v186 = vmul.f32 %v182, %v160
    %v187 = vmul.f32 %v183, %v173
    %v188 = vmul.f32 %v184, %v134
    %v189 = vmul.f32 %v185, %v147
    %v190 = vmul.f32 %v186, %v160
    %v191 = vmul.f32 %v187, %v173
    %v192 = vadd.f32 %v134, %v188
    %v193 = vadd.f32 %v147, %v189
    %v194 = vadd.f32 %v160, %v190
    %v195 = vadd.f32 %v173, %v191
    %v196 = vmul.f32 %v192, 0.7978846
    %v197 = vmul.f32 %v193, 0.7978846
    %v198 = vmul.f32 %v194, 0.7978846
    %v199 = vmul.f32 %v195, 0.7978846
    %v200 = vtanh.pop %v196
    %v201 = vtanh.pop %v197
    %v202 = vtanh.pop %v198
    %v203 = vtanh.pop %v199
    %v204 = vadd.f32 %v200, 1.0
    %v205 = vadd.f32 %v201, 1.0
    %v206 = vadd.f32 %v202, 1.0
    %v207 = vadd.f32 %v203, 1.0
    %v208 = vmul.f32 %v176, %v204
    %v209 = vmul.f32 %v177, %v205
    %v210 = vmul.f32 %v178, %v206
    %v211 = vmul.f32 %v179, %v207
    %v212 = vadd.f32 %v208, %v209
    %v213 = vadd.f32 %v212, %v210
    %v214 = vadd.f32 %v213, %v211
    %215 = vadd.xlane.f32.xlu0 %v214
    %v216 = vpop.xlane.xlu0 %215
    %v217 = vrcp.pop 512.0
    %v218 = vmul.f32 512.0, %v217
    %v219 = vsub.f32 1.0, %v218
    %v220 = vmul.f32 %v217, %v219
    %v221 = vadd.f32 %v217, %v220
    %vm222 = vweird.f32 %v217
    %v223 = vsel %vm222, %v217, %v221
    %v224 = vmul.f32 %v216, %v223
    %v225 = vsub.f32 %v208, %v224
    %v226 = vsub.f32 %v209, %v224
    %v227 = vsub.f32 %v210, %v224
    %v228 = vsub.f32 %v211, %v224
    %v229 = vmul.f32 %v225, %v225
    %v230 = vmul.f32 %v226, %v226
    %v231 = vmul.f32 %v227, %v227
    %v232 = vmul.f32 %v228, %v228
    %v233 = vadd.f32 %v229, %v230
    %v234 = vadd.f32 %v233, %v231
    %v235 = vadd.f32 %v234, %v232
    %236 = vadd.xlane.f32.xlu0 %v235
    %v237 = vpop.xlane.xlu0 %236
    %v238 = vmul.f32 %v237, %v223
    %v239 = vadd.f32 %v238, 1e-05
    %v240 = vrsqrt.pop %v239
    %v241 = vmul.f32 %v240, %v239
    %v242 = vmul.f32 %v241, %v240
    %v243 = vmul.f32 0.5, %v242
    %v244 = vsub.f32 1.5, %v243
    %v245 = vmul.f32 %v240, %v244
    %vm246 = vweird.f32 %v239
    %vm247 = vweird.f32 %v240
    %vm248 = vmor %vm246, %vm247
    %v249 = vsel %vm248, %v240, %v245
    %v250 = vmul.f32 %v225, %v249
    %v251 = vmul.f32 %v226, %v249
    %v252 = vmul.f32 %v227, %v249
    %v253 = vmul.f32 %v228, %v249
    %v254 = vperm.slane %v71, 1
    %v255 = vperm.slane %v72, 1
    %v256 = vperm.slane %v73, 1
    %v257 = vperm.slane %v74, 1
    %v258 = vmul.f32 %v250, %v254
    %v259 = vmul.f32 %v251, %v255
    %v260 = vmul.f32 %v252, %v256
    %v261 = vmul.f32 %v253, %v257
    %v262 = vperm.slane %v71, 2
    %v263 = vperm.slane %v72, 2
    %v264 = vperm.slane %v73, 2
    %v265 = vperm.slane %v74, 2
    %v266 = vadd.f32 %v258, %v262
    %v267 = vadd.f32 %v259, %v263
    %v268 = vadd.f32 %v260, %v264
    %v269 = vadd.f32 %v261, %v265
    %v270 = vperm.slane %v71, 3
    %v271 = vperm.slane %v72, 3
    %v272 = vperm.slane %v73, 3
    %v273 = vperm.slane %v74, 3
    %v274 = vmul.f32 %v266, %v270
    %v275 = vmul.f32 %v267, %v271
    %v276 = vmul.f32 %v268, %v272
    %v277 = vmul.f32 %v269, %v273
    %v278 = vadd.f32 %v274, %v275
    %v279 = vadd.f32 %v278, %v276
    %v280 = vadd.f32 %v279, %v277
    %281 = vadd.xlane.f32.xlu0 %v280
    %v282 = vpop.xlane.xlu0 %281
    %v283 = vstv %s75
    %v284 = vadd.f32 %v282, %v283
    %vm285 = vcmask 7168
    %286 = vst.msk [vmem:[%s4] sm:$0xff] %vm285, %v284
    // Predicated region
    $region30: #{tpu_custom_call.1} parent=1 // pred_check
      _
    $region31: #{tpu_custom_call.1} parent=1 // pred_check_branch
      %288 = sbr.rel (0) target = $region33
    $region32: #{tpu_custom_call.1} parent=1 // pred_region
      _
    $region33: #{tpu_custom_call.1} parent=1 // pred_fallthru
      _
    // Predicated region
    $region34: #{tpu_custom_call.1} parent=1 // pred_check
      _
    $region35: #{tpu_custom_call.1} parent=1 // pred_check_branch
      %290 = sbr.rel (0) target = $region37
    $region36: #{tpu_custom_call.1} parent=1 // pred_region
      _
    $region37: #{tpu_custom_call.1} parent=1 // pred_fallthru
      _
    %291 = vsyncpa [#allocation4], 1
    %292 = vsyncpa [#allocation6], 1

</llo_original>
